<compile_context>
chip_gen: v6e
topology: v6e:2x2x1
jax: 0.10.0
libtpu: 0.0.40
codegen_flags: <defaults>
</compile_context>

<pallas_src>
import functools
import math

import jax
import jax.numpy as jnp
from jax.experimental import pallas as pl
from jax.experimental.pallas import tpu as pltpu

LANE = 128
DEFAULT_TILE_ROWS = 1024       # (1024,128) f32 block = 512 KiB; ~1.8 MiB total
                               # VMEM with double-buffering -> fits every gen's
                               # default scoped limit (raise vmem_limit_bytes
                               # only if tile_rows is pushed much higher).
_LOG_CLAMP = math.log(1e-8)    # lower clamp of log(p_t); the upper clamp
                               # (1 - 1e-8) is a no-op in float32.


def _focal_loss_kernel(params_ref, n_ref, x_ref, t_ref, out_ref, acc_ref, *,
                       gamma):
    """One grid step = one (block_rows, 128) tile of flattened elements.

    params_ref: SMEM (3,) f32   [class_weight[0], class_weight[1], 1/n]
    n_ref     : SMEM (1,) i32   number of valid (un-padded) elements
    x_ref     : VMEM (block_rows, 128) f32   logits
    t_ref     : VMEM (block_rows, 128) i8    targets (0 / 1)
    out_ref   : SMEM (1, 1) f32   final mean loss (written at the last step)
    acc_ref   : VMEM (block_rows, 128) f32 scratch, per-lane partial sums
    """
    i = pl.program_id(0)
    block_rows, lane = acc_ref.shape

    @pl.when(i == 0)
    def _init():
        acc_ref[...] = jnp.zeros_like(acc_ref)

    x = x_ref[...]
    t = t_ref[...].astype(jnp.int32)       # cheap unpack; HBM traffic stays 1B
    is_pos = t == 1

    # Validity mask for the (possibly ragged) last tile / padded tail.
    row_ids = jax.lax.broadcasted_iota(jnp.int32, (block_rows, lane), 0)
    lane_ids = jax.lax.broadcasted_iota(jnp.int32, (block_rows, lane), 1)
    gidx = (i * block_rows + row_ids) * lane + lane_ids
    valid = gidx < n_ref[0]

    # p_t = sigmoid(x) if target==1 else sigmoid(-x); share one exp().
    xs = jnp.where(is_pos, x, -x)
    e = jnp.exp(-xs)
    p = 1.0 / (1.0 + e)                         # p_t
    one_minus_p = 1.0 - p
    # log(clamp(p_t, 1e-8, 1-1e-8)): lower clamp == max(., log(1e-8)); the
    # upper clamp rounds to 1.0 in f32 and is a no-op (same as PyTorch f32).
    log_p = jnp.maximum(-jnp.log(1.0 + e), _LOG_CLAMP)

    if gamma == 2:
        focal = one_minus_p * one_minus_p       # keep off the float pow path
    else:
        focal = one_minus_p ** gamma

    w = jnp.where(is_pos, params_ref[1], params_ref[0])
    loss = -w * focal * log_p
    acc_ref[...] += jnp.where(valid, loss, 0.0)

    @pl.when(i == pl.num_programs(0) - 1)
    def _finalize():
        # Single cross-lane/sublane reduce + scale by 1/n (size_average=True).
        out_ref[0, 0] = jnp.sum(acc_ref[...]) * params_ref[2]


def focal_loss_2d(logit, target, class_weight=None, gamma=2,
                  size_average=True, tile_rows=DEFAULT_TILE_ROWS):
    """Pallas implementation of FocalLoss2d.forward (type='sigmoid').

    tile_rows should be a multiple of 32 (int8 sublane packing); blocks larger
    than the array collapse to a single full-array block.
    """
    if not size_average:
        # TODO(synk): size_average=False returns the per-element loss tensor;
        # only the mean-reduced path is implemented in this kernel.
        raise NotImplementedError("only size_average=True is implemented")
    # TODO(synk): type='softmax' (multi-class) mode is not implemented.

    if class_weight is None:
        class_weight = [1.0, 1.0]

    n = int(logit.size)
    params = jnp.asarray(
        [float(class_weight[0]), float(class_weight[1]), 1.0 / n],
        dtype=jnp.float32)
    n_arr = jnp.asarray([n], dtype=jnp.int32)

    # Flatten (matches target.view(-1,1) / prob.view(-1,1)) and reshape to a
    # lane-dense (rows, 128) slab. Pad only when n is not a multiple of 128;
    # the tail is masked in-kernel, so no sentinel target values are needed.
    x = logit.reshape(-1).astype(jnp.float32)
    t = target.reshape(-1).astype(jnp.int8)
    rows = pl.cdiv(n, LANE)
    padded = rows * LANE
    if padded != n:
        x = jnp.pad(x, (0, padded - n))
        t = jnp.pad(t, (0, padded - n))
    x2 = x.reshape(rows, LANE)
    t2 = t.reshape(rows, LANE)

    block_rows = min(tile_rows, rows)
    grid = (pl.cdiv(rows, block_rows),)

    kernel = functools.partial(_focal_loss_kernel, gamma=gamma)

    out = pl.pallas_call(
        kernel,
        out_shape=jax.ShapeDtypeStruct((1, 1), jnp.float32),
        grid_spec=pltpu.PrefetchScalarGridSpec(
            num_scalar_prefetch=0,
            grid=grid,
            in_specs=[
                pl.BlockSpec(memory_space=pltpu.SMEM),               # params
                pl.BlockSpec(memory_space=pltpu.SMEM),               # n
                pl.BlockSpec((block_rows, LANE), lambda i: (i, 0)),  # logits
                pl.BlockSpec((block_rows, LANE), lambda i: (i, 0)),  # targets
            ],
            out_specs=pl.BlockSpec((1, 1), lambda i: (0, 0),
                                   memory_space=pltpu.SMEM),
            scratch_shapes=[pltpu.VMEM((block_rows, LANE), jnp.float32)],
        ),
        # Accumulator carried across the grid axis -> must stay "arbitrary".
        # TODO(synk): on v7x a leading "parallel" axis with per-core partial
        # sums would let both TensorCores stream half of the elements each.
        compiler_params=pltpu.CompilerParams(
            dimension_semantics=("arbitrary",)),
    )(params, n_arr, x2, t2)
    return out[0, 0]


def _reference_focal_loss(logit, target, class_weight=None, gamma=2):
    """Pure-JAX reference mirroring the PyTorch forward (sigmoid mode)."""
    if class_weight is None:
        class_weight = [1.0, 1.0]
    cw = jnp.asarray(class_weight, dtype=jnp.float32)
    x = logit.reshape(-1).astype(jnp.float32)
    t = target.reshape(-1).astype(jnp.int32)
    p1 = jax.nn.sigmoid(x)
    p = jnp.where(t == 1, p1, 1.0 - p1)
    p = jnp.clip(p, 1e-8, 1.0 - 1e-8)
    w = cw[t]
    loss = -w * (1.0 - p) ** gamma * jnp.log(p)
    return loss.mean()


if __name__ == "__main__":
    key = jax.random.PRNGKey(0)
    k1, k2, k3, k4 = jax.random.split(key, 4)

    # Binary segmentation style inputs (NCHW, one channel for sigmoid mode).
    logit = jax.random.normal(k1, (2, 1, 64, 64), dtype=jnp.float32)
    target = (jax.random.uniform(k2, (2, 1, 64, 64)) > 0.5).astype(jnp.float32)
    loss = jax.block_until_ready(focal_loss_2d(logit, target, gamma=2))
    ref = _reference_focal_loss(logit, target, gamma=2)
    assert jnp.allclose(loss, ref, atol=1e-5, rtol=1e-5), (loss, ref)

    # Ragged size (n % 128 != 0), class weights, small tile -> exercises the
    # multi-step grid, tail masking and partial last block.
    logit2 = jax.random.normal(k3, (2, 1, 60, 50), dtype=jnp.float32)
    target2 = (jax.random.uniform(k4, (2, 1, 60, 50)) > 0.3).astype(jnp.float32)
    loss2 = jax.block_until_ready(
        focal_loss_2d(logit2, target2, class_weight=[0.3, 0.7], gamma=2,
                      tile_rows=32))
    ref2 = _reference_focal_loss(logit2, target2, class_weight=[0.3, 0.7],
                                 gamma=2)
    assert jnp.allclose(loss2, ref2, atol=1e-5, rtol=1e-5), (loss2, ref2)

    print("KERNEL_OK")
</pallas_src>

<mosaic_0001>
module attributes {stable_mosaic.version = 11 : i64} {
  func.func @_focal_loss_kernel(%arg0: i32, %arg1: memref<3xf32, #tpu.memory_space<smem>>, %arg2: memref<1xi32, #tpu.memory_space<smem>>, %arg3: memref<64x128xf32, #tpu.memory_space<vmem>>, %arg4: memref<64x128xi8, #tpu.memory_space<vmem>>, %arg5: memref<1x1xf32, #tpu.memory_space<smem>>, %arg6: memref<64x128xf32, #tpu.memory_space<vmem>>) attributes {dimension_semantics = [#tpu.dimension_semantics<arbitrary>], iteration_bounds = array<i64: 1>, scalar_prefetch = 0 : i64, scratch_operands = 1 : i64, tpu.core_type = #tpu.core_type<tc>, window_params = [{transform_indices = @transform_0, window_bounds = array<i64: 3>}, {transform_indices = @transform_1, window_bounds = array<i64: 1>}, {transform_indices = @transform_2, window_bounds = array<i64: 64, 128>}, {transform_indices = @transform_3, window_bounds = array<i64: 64, 128>}, {transform_indices = @transform_4, window_bounds = array<i64: 1, 1>}]} {
    %c0_i32 = arith.constant 0 : i32
    %0 = arith.cmpi eq, %arg0, %c0_i32 : i32
    %1 = arith.extui %0 : i1 to i32
    %c0_i32_0 = arith.constant 0 : i32
    %2 = arith.cmpi ne, %1, %c0_i32_0 : i32
    scf.if %2 {
      %cst_21 = arith.constant 0.000000e+00 : f32
      %56 = vector.broadcast %cst_21 : f32 to vector<64x128xf32>
      %c0_22 = arith.constant 0 : index
      %c0_23 = arith.constant 0 : index
      %57 = vector.load %arg6[%c0_22, %c0_23] : memref<64x128xf32, #tpu.memory_space<vmem>>, vector<64x128xf32>
      tpu.vector_store %arg6[%c0_22, %c0_23], %56 {strides = array<i32>} : memref<64x128xf32, #tpu.memory_space<vmem>>, vector<64x128xf32>,
    } else {
    }
    %c0 = arith.constant 0 : index
    %c0_1 = arith.constant 0 : index
    %3 = vector.load %arg3[%c0, %c0_1] : memref<64x128xf32, #tpu.memory_space<vmem>>, vector<64x128xf32>
    %c0_2 = arith.constant 0 : index
    %c0_3 = arith.constant 0 : index
    %4 = vector.load %arg4[%c0_2, %c0_3] : memref<64x128xi8, #tpu.memory_space<vmem>>, vector<64x128xi8>
    %5 = arith.extsi %4 : vector<64x128xi8> to vector<64x128xi32>
    %c1_i32 = arith.constant 1 : i32
    %6 = vector.broadcast %c1_i32 : i32 to vector<64x128xi32>
    %7 = arith.cmpi eq, %5, %6 : vector<64x128xi32>
    %8 = tpu.iota {dimensions = array<i32: 0>} : vector<64x128xi32>
    %9 = tpu.iota {dimensions = array<i32: 1>} : vector<64x128xi32>
    %c64_i32 = arith.constant 64 : i32
    %10 = arith.muli %arg0, %c64_i32 : i32
    %11 = vector.broadcast %10 : i32 to vector<64x128xi32>
    %12 = arith.addi %11, %8 : vector<64x128xi32>
    %c128_i32 = arith.constant 128 : i32
    %13 = vector.broadcast %c128_i32 : i32 to vector<64x128xi32>
    %14 = arith.muli %12, %13 : vector<64x128xi32>
    %15 = arith.addi %14, %9 : vector<64x128xi32>
    %c0_4 = arith.constant 0 : index
    %16 = memref.load %arg2[%c0_4] : memref<1xi32, #tpu.memory_space<smem>>
    %17 = vector.broadcast %16 : i32 to vector<64x128xi32>
    %18 = arith.cmpi slt, %15, %17 : vector<64x128xi32>
    %cst = arith.constant 0.000000e+00 : f32
    %19 = vector.broadcast %cst : f32 to vector<64x128xf32>
    %20 = arith.subf %19, %3 : vector<64x128xf32>
    %21 = arith.select %7, %3, %20 : vector<64x128xi1>, vector<64x128xf32>
    %cst_5 = arith.constant 0.000000e+00 : f32
    %22 = vector.broadcast %cst_5 : f32 to vector<64x128xf32>
    %23 = arith.subf %22, %21 : vector<64x128xf32>
    %24 = math.exp %23 : vector<64x128xf32>
    %cst_6 = arith.constant 1.000000e+00 : f32
    %25 = vector.broadcast %cst_6 : f32 to vector<64x128xf32>
    %26 = arith.addf %25, %24 : vector<64x128xf32>
    %cst_7 = arith.constant 1.000000e+00 : f32
    %27 = vector.broadcast %cst_7 : f32 to vector<64x128xf32>
    %28 = arith.divf %27, %26 : vector<64x128xf32>
    %cst_8 = arith.constant 1.000000e+00 : f32
    %29 = vector.broadcast %cst_8 : f32 to vector<64x128xf32>
    %30 = arith.subf %29, %28 : vector<64x128xf32>
    %cst_9 = arith.constant 1.000000e+00 : f32
    %31 = vector.broadcast %cst_9 : f32 to vector<64x128xf32>
    %32 = arith.addf %31, %24 : vector<64x128xf32>
    %33 = math.log %32 : vector<64x128xf32>
    %cst_10 = arith.constant 0.000000e+00 : f32
    %34 = vector.broadcast %cst_10 : f32 to vector<64x128xf32>
    %35 = arith.subf %34, %33 : vector<64x128xf32>
    %cst_11 = arith.constant -18.420681 : f32
    %36 = vector.broadcast %cst_11 : f32 to vector<64x128xf32>
    %37 = arith.maximumf %35, %36 : vector<64x128xf32>
    %38 = arith.mulf %30, %30 : vector<64x128xf32>
    %c1 = arith.constant 1 : index
    %39 = memref.load %arg1[%c1] : memref<3xf32, #tpu.memory_space<smem>>
    %c0_12 = arith.constant 0 : index
    %40 = memref.load %arg1[%c0_12] : memref<3xf32, #tpu.memory_space<smem>>
    %41 = vector.broadcast %39 : f32 to vector<64x128xf32>
    %42 = vector.broadcast %40 : f32 to vector<64x128xf32>
    %43 = arith.select %7, %41, %42 : vector<64x128xi1>, vector<64x128xf32>
    %cst_13 = arith.constant 0.000000e+00 : f32
    %44 = vector.broadcast %cst_13 : f32 to vector<64x128xf32>
    %45 = arith.subf %44, %43 : vector<64x128xf32>
    %46 = arith.mulf %45, %38 : vector<64x128xf32>
    %47 = arith.mulf %46, %37 : vector<64x128xf32>
    %c0_14 = arith.constant 0 : index
    %c0_15 = arith.constant 0 : index
    %48 = vector.load %arg6[%c0_14, %c0_15] : memref<64x128xf32, #tpu.memory_space<vmem>>, vector<64x128xf32>
    %cst_16 = arith.constant 0.000000e+00 : f32
    %49 = vector.broadcast %cst_16 : f32 to vector<64x128xf32>
    %50 = arith.select %18, %47, %49 : vector<64x128xi1>, vector<64x128xf32>
    %51 = arith.addf %48, %50 : vector<64x128xf32>
    %c0_17 = arith.constant 0 : index
    %c0_18 = arith.constant 0 : index
    %52 = vector.load %arg6[%c0_17, %c0_18] : memref<64x128xf32, #tpu.memory_space<vmem>>, vector<64x128xf32>
    tpu.vector_store %arg6[%c0_17, %c0_18], %51 {strides = array<i32>} : memref<64x128xf32, #tpu.memory_space<vmem>>, vector<64x128xf32>,
    %c0_i32_19 = arith.constant 0 : i32
    %53 = arith.cmpi eq, %arg0, %c0_i32_19 : i32
    %54 = arith.extui %53 : i1 to i32
    %c0_i32_20 = arith.constant 0 : i32
    %55 = arith.cmpi ne, %54, %c0_i32_20 : i32
    scf.if %55 {
      %c0_21 = arith.constant 0 : index
      %c0_22 = arith.constant 0 : index
      %56 = vector.load %arg6[%c0_21, %c0_22] : memref<64x128xf32, #tpu.memory_space<vmem>>, vector<64x128xf32>
      %57 = vector.shape_cast %56 : vector<64x128xf32> to vector<1x64x128xf32>
      %cst_23 = arith.constant dense<0.000000e+00> : vector<1xf32>
      %58 = vector.multi_reduction <add>, %57, %cst_23 [1, 2] : vector<1x64x128xf32> to vector<1xf32>
      %59 = vector.shape_cast %58 : vector<1xf32> to vector<1x1x1xf32>
      %60 = vector.extract %59[0, 0, 0] : f32 from vector<1x1x1xf32>
      %c2 = arith.constant 2 : index
      %61 = memref.load %arg1[%c2] : memref<3xf32, #tpu.memory_space<smem>>
      %62 = arith.mulf %60, %61 : f32
      %c0_24 = arith.constant 0 : index
      %c0_25 = arith.constant 0 : index
      %63 = memref.load %arg5[%c0_24, %c0_25] : memref<1x1xf32, #tpu.memory_space<smem>>
      memref.store %62, %arg5[%c0_24, %c0_25] : memref<1x1xf32, #tpu.memory_space<smem>>
    } else {
    }
    return
  }
  func.func @transform_0(%arg0: i32) -> i32 {
    %c0_i32 = arith.constant 0 : i32
    %c0_i32_0 = arith.constant 0 : i32
    return %c0_i32 : i32
  }
  func.func @transform_1(%arg0: i32) -> i32 {
    %c0_i32 = arith.constant 0 : i32
    %c0_i32_0 = arith.constant 0 : i32
    return %c0_i32 : i32
  }
  func.func @transform_2(%arg0: i32) -> (i32, i32) {
    %c0_i32 = arith.constant 0 : i32
    %c0_i32_0 = arith.constant 0 : i32
    return %arg0, %c0_i32 : i32, i32
  }
  func.func @transform_3(%arg0: i32) -> (i32, i32) {
    %c0_i32 = arith.constant 0 : i32
    %c0_i32_0 = arith.constant 0 : i32
    return %arg0, %c0_i32 : i32, i32
  }
  func.func @transform_4(%arg0: i32) -> (i32, i32) {
    %c0_i32 = arith.constant 0 : i32
    %c0_i32_0 = arith.constant 0 : i32
    %c0_i32_1 = arith.constant 0 : i32
    return %c0_i32, %c0_i32_0 : i32, i32
  }
}

</mosaic_0001>

<llo_original>
// kernel: tpu_custom_call.1
$region0: #{tpu_custom_call.1}
  #allocation0 [shape = 'u32[]', space=smem, size = 0x4, offset = 0x4, fixed_abs, tag = 'smem constant byte address 0x4 - core index']
  #allocation1 [shape = 'u32[144,128]{1,0:T(1,128)}', space=vmem, size = 0x12000, scoped, tag = 'internal scratch']
  #allocation2 [shape = 'f32[64,128]{1,0:T(8,128)}', space=vmem, size = 0x8000, scoped, tag = 'scratch operand']
  #allocation3 [shape = 's32[1]{0:T(128)S(6)}', space=smem, size = 0x200, scoped, tag = 'scoped memory for tpu_custom_call.1']
  %s0 = inlined_call_operand.vmem [shape: f32[3], index: 0, kind: input, shape index: {}]
  %s1 = inlined_call_operand.<no memory space> [shape: s32[1], index: 1, kind: input, shape index: {}]
  %s2 = inlined_call_operand.hbm [shape: f32[64,128], index: 2, kind: input, shape index: {}]
  %s3 = inlined_call_operand.hbm [shape: s8[64,128], index: 3, kind: input, shape index: {}]
  %s4 = inlined_call_operand.hbm [shape: f32[1,1], index: 4, kind: output, shape index: {}]
  %s5 = sld [smem:[#allocation0]]
  $region46: #{tpu_custom_call.1} parent=0
    _
  %s7 = ssub.s32 1, %s5
  %s8 = scalar_select 0, %s7, %s5
  %9 = sst [smem:[#allocation3]] %s1
  $region1: #{tpu_custom_call.1} parent=0
    #allocation4 [shape = 'u8[512]{0}', space=smem, size = 0x200, scoped, tag = 'input window, operand 0, single buffered']
    #allocation5 [shape = 's32[1]{0}', space=sflag, size = 0x4, scoped, tag = 'scoped memory for tpu_custom_call.1']
    #allocation6 [shape = 's32[1]{0}', space=sflag, size = 0x4, scoped, tag = 'scoped memory for tpu_custom_call.1']
    #allocation7 [shape = 's32[1]{0}', space=sflag, size = 0x4, scoped, tag = 'scoped memory for tpu_custom_call.1']
    #allocation8 [shape = 'u8[32768]{0}', space=vmem, size = 0x8000, scoped, tag = 'input window, operand 2, single buffered']
    #allocation9 [shape = 'u8[8192]{0}', space=vmem, size = 0x2000, scoped, tag = 'input window, operand 3, single buffered']
    #allocation10 [shape = 's32[1]{0}', space=sflag, size = 0x4, scoped, tag = 'scoped memory for tpu_custom_call.1']
    #allocation11 [shape = 'u8[512]{0}', space=smem, size = 0x200, scoped, tag = 'output window, operand 0, single buffered']
    %10 = vsyncpa [#allocation7], 0
    %11 = vsyncpa [#allocation5], 0
    %12 = vsyncpa [#allocation10], 0
    %13 = vsyncpa [#allocation6], 0
    // Predicated region
    $region2: #{tpu_custom_call.1} parent=1 // pred_check
      _
    $region3: #{tpu_custom_call.1} parent=1 // pred_check_branch
      %15 = sbr.rel (0) target = $region5
    $region4: #{tpu_custom_call.1} parent=1 // pred_region
      %s17 = ssub.s32 16, 16
      %18 = vsyncadd [#allocation7], %s17
      %s20 = sshll.u32 %s0, 4
      %s21 = int_to_ptr.vmem [resolvable:$true] %s20
      %23 = dma.vmem_to_smem %s21, 16, [#allocation4], [#allocation7]
    $region5: #{tpu_custom_call.1} parent=1 // pred_fallthru
      _
    // Predicated region
    $region6: #{tpu_custom_call.1} parent=1 // pred_check
      _
    $region7: #{tpu_custom_call.1} parent=1 // pred_check_branch
      %25 = sbr.rel (0) target = $region9
    $region8: #{tpu_custom_call.1} parent=1 // pred_region
      _
    $region9: #{tpu_custom_call.1} parent=1 // pred_fallthru
      _
    // Predicated region
    $region10: #{tpu_custom_call.1} parent=1 // pred_check
      _
    $region11: #{tpu_custom_call.1} parent=1 // pred_check_branch
      %27 = sbr.rel (0) target = $region13
    $region12: #{tpu_custom_call.1} parent=1 // pred_region
      %s29 = ssub.s32 1024, 1024
      %30 = vsyncadd [#allocation5], %s29
      %s31 = sshll.u32 [#allocation8], 4
      %s32 = int_to_ptr.vmem [resolvable:$true] %s31
      %37 = dma.hbm_to_vmem [thread:$0]  %s2, 1024, %s32, [#allocation5], 128, 128, 8
    $region13: #{tpu_custom_call.1} parent=1 // pred_fallthru
      _
    // Predicated region
    $region14: #{tpu_custom_call.1} parent=1 // pred_check
      _
    $region15: #{tpu_custom_call.1} parent=1 // pred_check_branch
      %39 = sbr.rel (0) target = $region17
    $region16: #{tpu_custom_call.1} parent=1 // pred_region
      %s41 = ssub.s32 256, 256
      %42 = vsyncadd [#allocation10], %s41
      %s43 = sshll.u32 [#allocation9], 4
      %s44 = int_to_ptr.vmem [resolvable:$true] %s43
      %49 = dma.hbm_to_vmem [thread:$0]  %s3, 256, %s44, [#allocation10], 128, 128, 8
    $region17: #{tpu_custom_call.1} parent=1 // pred_fallthru
      _
    // Predicated region
    $region18: #{tpu_custom_call.1} parent=1 // pred_check
      _
    $region19: #{tpu_custom_call.1} parent=1 // pred_check_branch
      %51 = sbr.rel (0) target = $region21
    $region20: #{tpu_custom_call.1} parent=1 // pred_region
      %52 = dma.done [#allocation7], 16
    $region21: #{tpu_custom_call.1} parent=1 // pred_fallthru
      _
    // Predicated region
    $region22: #{tpu_custom_call.1} parent=1 // pred_check
      _
    $region23: #{tpu_custom_call.1} parent=1 // pred_check_branch
      %54 = sbr.rel (0) target = $region25
    $region24: #{tpu_custom_call.1} parent=1 // pred_region
      %55 = dma.done [#allocation5], 1024
    $region25: #{tpu_custom_call.1} parent=1 // pred_fallthru
      _
    // Predicated region
    $region26: #{tpu_custom_call.1} parent=1 // pred_check
      _
    $region27: #{tpu_custom_call.1} parent=1 // pred_check_branch
      %57 = sbr.rel (0) target = $region29
    $region28: #{tpu_custom_call.1} parent=1 // pred_region
      %58 = dma.done [#allocation10], 256
    $region29: #{tpu_custom_call.1} parent=1 // pred_fallthru
      _
    %59 = sfence
    %p60 = scmp.eq.s32.totalorder 0, 0
    // Predicated region
    $region30: #{tpu_custom_call.1} parent=1 // pred_check
      %p61 = pneg %p60
    $region31: #{tpu_custom_call.1} parent=1 // pred_check_branch
      %63 = sbr.rel (%p61) target = $region33
    $region32: #{tpu_custom_call.1} parent=1 // pred_region
      %64 = vst [vmem:[#allocation2] sm:$0xff] 0.0
      %65 = vst [vmem:[#allocation2 + $0x8] sm:$0xff] 0.0
      %66 = vst [vmem:[#allocation2 + $0x10] sm:$0xff] 0.0
      %67 = vst [vmem:[#allocation2 + $0x18] sm:$0xff] 0.0
      %68 = vst [vmem:[#allocation2 + $0x20] sm:$0xff] 0.0
      %69 = vst [vmem:[#allocation2 + $0x28] sm:$0xff] 0.0
      %70 = vst [vmem:[#allocation2 + $0x30] sm:$0xff] 0.0
      %71 = vst [vmem:[#allocation2 + $0x38] sm:$0xff] 0.0
    $region33: #{tpu_custom_call.1} parent=1 // pred_fallthru
      _
    %v72 = vld [vmem:[#allocation8] sm:$0xff]
    %v73 = vld [vmem:[#allocation8 + $0x8] sm:$0xff]
    %v74 = vld [vmem:[#allocation8 + $0x10] sm:$0xff]
    %v75 = vld [vmem:[#allocation8 + $0x18] sm:$0xff]
    %v76 = vld [vmem:[#allocation8 + $0x20] sm:$0xff]
    %v77 = vld [vmem:[#allocation8 + $0x28] sm:$0xff]
    %v78 = vld [vmem:[#allocation8 + $0x30] sm:$0xff]
    %v79 = vld [vmem:[#allocation8 + $0x38] sm:$0xff]
    %v80 = vld [vmem:[#allocation9] sm:$0xff]
    %v81 = vld [vmem:[#allocation9 + $0x8] sm:$0xff]
    %v82 = vunpack.c.0.s8 %v80
    %v83 = vunpack.c.1.s8 %v80
    %v84 = vunpack.c.2.s8 %v80
    %v85 = vunpack.c.3.s8 %v80
    %v86 = vunpack.c.0.s8 %v81
    %v87 = vunpack.c.1.s8 %v81
    %v88 = vunpack.c.2.s8 %v81
    %v89 = vunpack.c.3.s8 %v81
    %vm90 = vcmp.eq.s32.totalorder %v82, 1
    %vm91 = vcmp.eq.s32.totalorder %v83, 1
    %vm92 = vcmp.eq.s32.totalorder %v84, 1
    %vm93 = vcmp.eq.s32.totalorder %v85, 1
    %vm94 = vcmp.eq.s32.totalorder %v86, 1
    %vm95 = vcmp.eq.s32.totalorder %v87, 1
    %vm96 = vcmp.eq.s32.totalorder %v88, 1
    %vm97 = vcmp.eq.s32.totalorder %v89, 1
    %v98 = vlaneseq
    %v99 = vshrl.u32 %v98, 7
    %v100 = vadd.s32 %v99, 8
    %v101 = vadd.s32 %v99, 16
    %v102 = vadd.s32 %v99, 24
    %v103 = vadd.s32 %v99, 32
    %v104 = vadd.s32 %v99, 40
    %v105 = vadd.s32 %v99, 48
    %v106 = vadd.s32 %v99, 56
    %v107 = vlaneseq
    %v108 = vand.u32 %v107, 127
    %s109 = smul.u32 0, 64
    %v110 = vstv %s109
    %v111 = vadd.s32 %v110, %v99
    %v112 = vadd.s32 %v110, %v100
    %v113 = vadd.s32 %v110, %v101
    %v114 = vadd.s32 %v110, %v102
    %v115 = vadd.s32 %v110, %v103
    %v116 = vadd.s32 %v110, %v104
    %v117 = vadd.s32 %v110, %v105
    %v118 = vadd.s32 %v110, %v106
    %v119 = vmul.u32 %v111, 128
    %v120 = vmul.u32 %v112, 128
    %v121 = vmul.u32 %v113, 128
    %v122 = vmul.u32 %v114, 128
    %v123 = vmul.u32 %v115, 128
    %v124 = vmul.u32 %v116, 128
    %v125 = vmul.u32 %v117, 128
    %v126 = vmul.u32 %v118, 128
    %v127 = vadd.s32 %v119, %v108
    %v128 = vadd.s32 %v120, %v108
    %v129 = vadd.s32 %v121, %v108
    %v130 = vadd.s32 %v122, %v108
    %v131 = vadd.s32 %v123, %v108
    %v132 = vadd.s32 %v124, %v108
    %v133 = vadd.s32 %v125, %v108
    %v134 = vadd.s32 %v126, %v108
    %s135 = sld [smem:[#allocation3]]
    %v136 = vstv %s135
    %vm137 = vcmp.lt.s32.totalorder %v127, %v136
    %vm138 = vcmp.lt.s32.totalorder %v128, %v136
    %vm139 = vcmp.lt.s32.totalorder %v129, %v136
    %vm140 = vcmp.lt.s32.totalorder %v130, %v136
    %vm141 = vcmp.lt.s32.totalorder %v131, %v136
    %vm142 = vcmp.lt.s32.totalorder %v132, %v136
    %vm143 = vcmp.lt.s32.totalorder %v133, %v136
    %vm144 = vcmp.lt.s32.totalorder %v134, %v136
    %v145 = vsub.f32 0.0, %v72
    %v146 = vsub.f32 0.0, %v73
    %v147 = vsub.f32 0.0, %v74
    %v148 = vsub.f32 0.0, %v75
    %v149 = vsub.f32 0.0, %v76
    %v150 = vsub.f32 0.0, %v77
    %v151 = vsub.f32 0.0, %v78
    %v152 = vsub.f32 0.0, %v79
    %v153 = vsel %vm90, %v72, %v145
    %v154 = vsel %vm91, %v73, %v146
    %v155 = vsel %vm92, %v74, %v147
    %v156 = vsel %vm93, %v75, %v148
    %v157 = vsel %vm94, %v76, %v149
    %v158 = vsel %vm95, %v77, %v150
    %v159 = vsel %vm96, %v78, %v151
    %v160 = vsel %vm97, %v79, %v152
    %v161 = vsub.f32 0.0, %v153
    %v162 = vsub.f32 0.0, %v154
    %v163 = vsub.f32 0.0, %v155
    %v164 = vsub.f32 0.0, %v156
    %v165 = vsub.f32 0.0, %v157
    %v166 = vsub.f32 0.0, %v158
    %v167 = vsub.f32 0.0, %v159
    %v168 = vsub.f32 0.0, %v160
    %v169 = vmul.f32 %v161, 1.442695
    %v170 = vpow.pop %v169
    %v171 = vmul.f32 %v162, 1.442695
    %v172 = vpow.pop %v171
    %v173 = vmul.f32 %v163, 1.442695
    %v174 = vpow.pop %v173
    %v175 = vmul.f32 %v164, 1.442695
    %v176 = vpow.pop %v175
    %v177 = vmul.f32 %v165, 1.442695
    %v178 = vpow.pop %v177
    %v179 = vmul.f32 %v166, 1.442695
    %v180 = vpow.pop %v179
    %v181 = vmul.f32 %v167, 1.442695
    %v182 = vpow.pop %v181
    %v183 = vmul.f32 %v168, 1.442695
    %v184 = vpow.pop %v183
    %v185 = vadd.f32 %v170, 1.0
    %v186 = vadd.f32 %v172, 1.0
    %v187 = vadd.f32 %v174, 1.0
    %v188 = vadd.f32 %v176, 1.0
    %v189 = vadd.f32 %v178, 1.0
    %v190 = vadd.f32 %v180, 1.0
    %v191 = vadd.f32 %v182, 1.0
    %v192 = vadd.f32 %v184, 1.0
    %v193 = vrcp.pop %v185
    %v194 = vmul.f32 1.0, %v193
    %v195 = vrcp.pop %v186
    %v196 = vmul.f32 1.0, %v195
    %v197 = vrcp.pop %v187
    %v198 = vmul.f32 1.0, %v197
    %v199 = vrcp.pop %v188
    %v200 = vmul.f32 1.0, %v199
    %v201 = vrcp.pop %v189
    %v202 = vmul.f32 1.0, %v201
    %v203 = vrcp.pop %v190
    %v204 = vmul.f32 1.0, %v203
    %v205 = vrcp.pop %v191
    %v206 = vmul.f32 1.0, %v205
    %v207 = vrcp.pop %v192
    %v208 = vmul.f32 1.0, %v207
    %v209 = vsub.f32 1.0, %v194
    %v210 = vsub.f32 1.0, %v196
    %v211 = vsub.f32 1.0, %v198
    %v212 = vsub.f32 1.0, %v200
    %v213 = vsub.f32 1.0, %v202
    %v214 = vsub.f32 1.0, %v204
    %v215 = vsub.f32 1.0, %v206
    %v216 = vsub.f32 1.0, %v208
    %v217 = vlog2.pop %v185
    %v218 = vmul.f32 %v217, 0.6931472
    %v219 = vlog2.pop %v186
    %v220 = vmul.f32 %v219, 0.6931472
    %v221 = vlog2.pop %v187
    %v222 = vmul.f32 %v221, 0.6931472
    %v223 = vlog2.pop %v188
    %v224 = vmul.f32 %v223, 0.6931472
    %v225 = vlog2.pop %v189
    %v226 = vmul.f32 %v225, 0.6931472
    %v227 = vlog2.pop %v190
    %v228 = vmul.f32 %v227, 0.6931472
    %v229 = vlog2.pop %v191
    %v230 = vmul.f32 %v229, 0.6931472
    %v231 = vlog2.pop %v192
    %v232 = vmul.f32 %v231, 0.6931472
    %v233 = vsub.f32 0.0, %v218
    %v234 = vsub.f32 0.0, %v220
    %v235 = vsub.f32 0.0, %v222
    %v236 = vsub.f32 0.0, %v224
    %v237 = vsub.f32 0.0, %v226
    %v238 = vsub.f32 0.0, %v228
    %v239 = vsub.f32 0.0, %v230
    %v240 = vsub.f32 0.0, %v232
    %v241 = vmax.f32 %v233, -18.420681
    %v242 = vmax.f32 %v234, -18.420681
    %v243 = vmax.f32 %v235, -18.420681
    %v244 = vmax.f32 %v236, -18.420681
    %v245 = vmax.f32 %v237, -18.420681
    %v246 = vmax.f32 %v238, -18.420681
    %v247 = vmax.f32 %v239, -18.420681
    %v248 = vmax.f32 %v240, -18.420681
    %v249 = vmul.f32 %v209, %v209
    %v250 = vmul.f32 %v210, %v210
    %v251 = vmul.f32 %v211, %v211
    %v252 = vmul.f32 %v212, %v212
    %v253 = vmul.f32 %v213, %v213
    %v254 = vmul.f32 %v214, %v214
    %v255 = vmul.f32 %v215, %v215
    %v256 = vmul.f32 %v216, %v216
    %s257 = sld [smem:[#allocation4 + $0x1]]
    %s258 = sld [smem:[#allocation4]]
    %v259 = vstv %s257
    %v260 = vstv %s258
    %v261 = vsel %vm90, %v259, %v260
    %v262 = vsel %vm91, %v259, %v260
    %v263 = vsel %vm92, %v259, %v260
    %v264 = vsel %vm93, %v259, %v260
    %v265 = vsel %vm94, %v259, %v260
    %v266 = vsel %vm95, %v259, %v260
    %v267 = vsel %vm96, %v259, %v260
    %v268 = vsel %vm97, %v259, %v260
    %v269 = vsub.f32 0.0, %v261
    %v270 = vsub.f32 0.0, %v262
    %v271 = vsub.f32 0.0, %v263
    %v272 = vsub.f32 0.0, %v264
    %v273 = vsub.f32 0.0, %v265
    %v274 = vsub.f32 0.0, %v266
    %v275 = vsub.f32 0.0, %v267
    %v276 = vsub.f32 0.0, %v268
    %v277 = vmul.f32 %v269, %v249
    %v278 = vmul.f32 %v270, %v250
    %v279 = vmul.f32 %v271, %v251
    %v280 = vmul.f32 %v272, %v252
    %v281 = vmul.f32 %v273, %v253
    %v282 = vmul.f32 %v274, %v254
    %v283 = vmul.f32 %v275, %v255
    %v284 = vmul.f32 %v276, %v256
    %v285 = vmul.f32 %v277, %v241
    %v286 = vmul.f32 %v278, %v242
    %v287 = vmul.f32 %v279, %v243
    %v288 = vmul.f32 %v280, %v244
    %v289 = vmul.f32 %v281, %v245
    %v290 = vmul.f32 %v282, %v246
    %v291 = vmul.f32 %v283, %v247
    %v292 = vmul.f32 %v284, %v248
    %v293 = vld [vmem:[#allocation2] sm:$0xff]
    %v294 = vld [vmem:[#allocation2 + $0x8] sm:$0xff]
    %v295 = vld [vmem:[#allocation2 + $0x10] sm:$0xff]
    %v296 = vld [vmem:[#allocation2 + $0x18] sm:$0xff]
    %v297 = vld [vmem:[#allocation2 + $0x20] sm:$0xff]
    %v298 = vld [vmem:[#allocation2 + $0x28] sm:$0xff]
    %v299 = vld [vmem:[#allocation2 + $0x30] sm:$0xff]
    %v300 = vld [vmem:[#allocation2 + $0x38] sm:$0xff]
    %v301 = vsel %vm137, %v285, 0.0
    %v302 = vsel %vm138, %v286, 0.0
    %v303 = vsel %vm139, %v287, 0.0
    %v304 = vsel %vm140, %v288, 0.0
    %v305 = vsel %vm141, %v289, 0.0
    %v306 = vsel %vm142, %v290, 0.0
    %v307 = vsel %vm143, %v291, 0.0
    %v308 = vsel %vm144, %v292, 0.0
    %v309 = vadd.f32 %v293, %v301
    %v310 = vadd.f32 %v294, %v302
    %v311 = vadd.f32 %v295, %v303
    %v312 = vadd.f32 %v296, %v304
    %v313 = vadd.f32 %v297, %v305
    %v314 = vadd.f32 %v298, %v306
    %v315 = vadd.f32 %v299, %v307
    %v316 = vadd.f32 %v300, %v308
    %317 = vst [vmem:[#allocation2] sm:$0xff] %v309
    %318 = vst [vmem:[#allocation2 + $0x8] sm:$0xff] %v310
    %319 = vst [vmem:[#allocation2 + $0x10] sm:$0xff] %v311
    %320 = vst [vmem:[#allocation2 + $0x18] sm:$0xff] %v312
    %321 = vst [vmem:[#allocation2 + $0x20] sm:$0xff] %v313
    %322 = vst [vmem:[#allocation2 + $0x28] sm:$0xff] %v314
    %323 = vst [vmem:[#allocation2 + $0x30] sm:$0xff] %v315
    %324 = vst [vmem:[#allocation2 + $0x38] sm:$0xff] %v316
    // Predicated region
    $region34: #{tpu_custom_call.1} parent=1 // pred_check
      %p325 = pneg %p60
    $region35: #{tpu_custom_call.1} parent=1 // pred_check_branch
      %327 = sbr.rel (%p325) target = $region37
    $region36: #{tpu_custom_call.1} parent=1 // pred_region
      %v328 = vld [vmem:[#allocation2] sm:$0xff]
      %v329 = vld [vmem:[#allocation2 + $0x8] sm:$0xff]
      %v330 = vld [vmem:[#allocation2 + $0x10] sm:$0xff]
      %v331 = vld [vmem:[#allocation2 + $0x18] sm:$0xff]
      %v332 = vld [vmem:[#allocation2 + $0x20] sm:$0xff]
      %v333 = vld [vmem:[#allocation2 + $0x28] sm:$0xff]
      %v334 = vld [vmem:[#allocation2 + $0x30] sm:$0xff]
      %v335 = vld [vmem:[#allocation2 + $0x38] sm:$0xff]
      %v336 = vadd.f32 %v328, %v329
      %v337 = vadd.f32 %v336, %v330
      %v338 = vadd.f32 %v337, %v331
      %v339 = vadd.f32 %v338, %v332
      %v340 = vadd.f32 %v339, %v333
      %v341 = vadd.f32 %v340, %v334
      %v342 = vadd.f32 %v341, %v335
      %343 = vadd.xlane.f32.xlu0 %v342
      %v344 = vpop.xlane.xlu0 %343
      %v345 = vrot.slane %v344, 4
      %v346 = vadd.f32 %v344, %v345
      %v347 = vrot.slane %v346, 2
      %v348 = vadd.f32 %v346, %v347
      %v349 = vrot.slane %v348, 1
      %v350 = vadd.f32 %v348, %v349
      %s351 = vtos %v350
      %s352 = sld [smem:[#allocation4 + $0x2]]
      %s353 = smul.f32 %s351, %s352
      %s354 = scalar_lea.smem [#allocation11], 0
      %355 = sst [smem:[%s354]] %s353
    $region37: #{tpu_custom_call.1} parent=1 // pred_fallthru
      _
    // Predicated region
    $region38: #{tpu_custom_call.1} parent=1 // pred_check
      _
    $region39: #{tpu_custom_call.1} parent=1 // pred_check_branch
      %357 = sbr.rel (0) target = $region41
    $region40: #{tpu_custom_call.1} parent=1 // pred_region
      %s359 = ssub.s32 16, 16
      %360 = vsyncadd [#allocation6], %s359
      %363 = dma.smem_to_hbm [#allocation11], 16, %s4, [#allocation6]
    $region41: #{tpu_custom_call.1} parent=1 // pred_fallthru
      _
    // Predicated region
    $region42: #{tpu_custom_call.1} parent=1 // pred_check
      _
    $region43: #{tpu_custom_call.1} parent=1 // pred_check_branch
      %365 = sbr.rel (0) target = $region45
    $region44: #{tpu_custom_call.1} parent=1 // pred_region
      %366 = dma.done [#allocation6], 16
    $region45: #{tpu_custom_call.1} parent=1 // pred_fallthru
      _
    %367 = sfence
    %368 = vsyncpa [#allocation5], 1
    %369 = vsyncpa [#allocation10], 1
    %370 = vsyncpa [#allocation6], 1
    %371 = vsyncpa [#allocation7], 1

</llo_original>
